<compile_context>
chip_gen: v7x
topology: tpu7x:2x2x1
jax: 0.10.0
libtpu: 0.0.40
codegen_flags: <defaults>
</compile_context>

<pallas_src>
import jax
import jax.numpy as jnp
from jax.experimental import pallas as pl
from jax.experimental.pallas import tpu as pltpu


def _squeeze_copy_kernel(x_ref, o_ref):
    # Both refs are (1, tc, W): the squeeze already happened in the BlockSpec
    # (pl.Squeezed() on the input's size-1 axis), so this is a pure copy.
    o_ref[...] = x_ref[...]


def _pick_c_tile(C, W, itemsize, cap_bytes=8 * 1024 * 1024):
    """Channel-tile size: full extent unless one block would be too large.

    Full extent on the output's last two dims (C, W) is always layout-legal.
    Only for very large C*W do we tile C with a sublane-aligned (multiple of 8)
    divisor so double-buffered in+out blocks stay far below VMEM limits.
    """
    if C * W * itemsize <= cap_bytes:
        return C
    for tc in (1024, 512, 256, 128, 64, 32, 16, 8):
        if C % tc == 0 and tc * W * itemsize <= cap_bytes:
            return tc
    return C  # full extent is always legal w.r.t. the (8,128) rule


def squeeze_dim2(x):
    """Pallas equivalent of torch.squeeze(x, 2) for x of shape (B, C, 1, W)."""
    B, C, one, W = x.shape
    assert one == 1, "dim 2 must be size 1 to be squeezed (torch keeps it otherwise)"

    itemsize = jnp.dtype(x.dtype).itemsize
    tc = _pick_c_tile(C, W, itemsize)
    grid = (B, C // tc)

    return pl.pallas_call(
        _squeeze_copy_kernel,
        out_shape=jax.ShapeDtypeStruct((B, C, W), x.dtype),
        grid=grid,
        in_specs=[
            # Squeeze axis 2 inside the BlockSpec: kernel ref is (1, tc, W).
            pl.BlockSpec((1, tc, pl.Squeezed(), W), lambda b, c: (b, c, 0, 0)),
        ],
        out_specs=pl.BlockSpec((1, tc, W), lambda b, c: (b, c, 0)),
        compiler_params=pltpu.CompilerParams(
            # Independent copies on every grid step -> shard across TCs on v7x.
            dimension_semantics=("parallel", "parallel"),
        ),
    )(x)


if __name__ == "__main__":
    key = jax.random.PRNGKey(0)
    B, C, W = 2, 4, 16
    x = jax.random.normal(key, (B, C, 1, W), dtype=jnp.float32)

    ref = jnp.squeeze(x, axis=2)

    y = squeeze_dim2(x)
    jax.block_until_ready(y)

    assert y.shape == (B, C, W), y.shape
    assert jnp.array_equal(y, ref), "mismatch vs reference squeeze"

    print("KERNEL_OK")
</pallas_src>

<mosaic_0001>
module attributes {stable_mosaic.version = 11 : i64} {
  func.func @_squeeze_copy_kernel(%arg0: i32, %arg1: i32, %arg2: memref<1x4x1x16xf32, #tpu.memory_space<vmem>>, %arg3: memref<1x4x16xf32, #tpu.memory_space<vmem>>) attributes {dimension_semantics = [#tpu.dimension_semantics<parallel>, #tpu.dimension_semantics<parallel>], iteration_bounds = array<i64: 2, 1>, scalar_prefetch = 0 : i64, scratch_operands = 0 : i64, tpu.core_type = #tpu.core_type<tc>, window_params = [{transform_indices = @transform_0, window_bounds = array<i64: 1, 4, 1, 16>}, {transform_indices = @transform_1, window_bounds = array<i64: 1, 4, 16>}]} {
    %c0 = arith.constant 0 : index
    %c0_0 = arith.constant 0 : index
    %c0_1 = arith.constant 0 : index
    %c0_2 = arith.constant 0 : index
    %0 = vector.load %arg2[%c0, %c0_0, %c0_1, %c0_2] : memref<1x4x1x16xf32, #tpu.memory_space<vmem>>, vector<1x4x1x16xf32>
    %1 = vector.shape_cast %0 : vector<1x4x1x16xf32> to vector<1x4x16xf32>
    %c0_3 = arith.constant 0 : index
    %c0_4 = arith.constant 0 : index
    %c0_5 = arith.constant 0 : index
    %2 = vector.load %arg3[%c0_3, %c0_4, %c0_5] : memref<1x4x16xf32, #tpu.memory_space<vmem>>, vector<1x4x16xf32>
    tpu.vector_store %arg3[%c0_3, %c0_4, %c0_5], %1 {strides = array<i32>} : memref<1x4x16xf32, #tpu.memory_space<vmem>>, vector<1x4x16xf32>,
    return
  }
  func.func @transform_0(%arg0: i32, %arg1: i32) -> (i32, i32, i32, i32) {
    %c0_i32 = arith.constant 0 : i32
    %c0_i32_0 = arith.constant 0 : i32
    %c0_i32_1 = arith.constant 0 : i32
    return %arg0, %arg1, %c0_i32, %c0_i32_0 : i32, i32, i32, i32
  }
  func.func @transform_1(%arg0: i32, %arg1: i32) -> (i32, i32, i32) {
    %c0_i32 = arith.constant 0 : i32
    %c0_i32_0 = arith.constant 0 : i32
    return %arg0, %arg1, %c0_i32 : i32, i32, i32
  }
}

</mosaic_0001>

<llo_original>
// kernel: tpu_custom_call.1
$region0: #{tpu_custom_call.1}
  #allocation0 [shape = 'u32[]', space=smem, size = 0x4, offset = 0x4, fixed_abs, tag = 'smem constant byte address 0x4 - core index']
  #allocation1 [shape = 'u32[144,128]{1,0:T(1,128)}', space=vmem, size = 0x12000, scoped, tag = 'internal scratch']
  %s0 = inlined_call_operand.hbm [shape: f32[2,4,1,16], index: 0, kind: input, shape index: {}]
  %s1 = inlined_call_operand.hbm [shape: f32[2,4,16], index: 1, kind: output, shape index: {}]
  %s2 = sld [smem:[#allocation0]]
  $region41: #{tpu_custom_call.1} parent=0
    _
  %s4 = ssub.s32 1, %s2
  %s5 = scalar_select 0, %s4, %s2
  $region1: #{tpu_custom_call.1} parent=0
    #allocation2 [shape = 'u8[4096]{0}', space=vmem, size = 0x1000, scoped, tag = 'input window, operand 0']
    #allocation3 [shape = 's32[2]{0}', space=sflag, size = 0x8, scoped, tag = 'scoped memory for tpu_custom_call.1']
    #allocation4 [shape = 's32[2]{0}', space=sflag, size = 0x8, scoped, tag = 'scoped memory for tpu_custom_call.1']
    #allocation5 [shape = 'u8[4096]{0}', space=vmem, size = 0x1000, scoped, tag = 'output window, operand 0']
    %6 = vsyncpa [#allocation3], 0
    %s7 = scalar_lea.sflag [#allocation3], 1
    %8 = vsyncpa %s7, 0
    %9 = vsyncpa [#allocation4], 0
    %s10 = scalar_lea.sflag [#allocation4], 1
    %11 = vsyncpa %s10, 0
    loop: start=0, step=1, limit=4
    $region2: #{tpu_custom_call.1} parent=1 // loop_pre_header
      _
    $region3: #{tpu_custom_call.1} parent=1 // loop_header
      %s13 = sphi 0, %s17
      %p14 = scmp.ge.s32.totalorder %s13, 4
      %s20 = sphi 0, %s32
      %s21 = sphi 0, %s28
      %s22 = sphi 0, %s20
      %s23 = sphi 0, %s21
      %s24 = sphi 0, %s22
      %s25 = sphi 0, %s23
      %s37 = sphi 0, %s39
      %s40 = sphi 0, %s37
      %s41 = sphi 0, %s40
      %s57 = sphi 0, %s41
      %s65 = sphi 0, %s67
      %s68 = sphi 0, %s65
      %s69 = sphi 0, %s68
      %s85 = sphi 0, %s69
    $region4: #{tpu_custom_call.1} parent=1 // loop_header_branch
      %16 = sbr.rel (%p14) target = $region8
    $region5: #{tpu_custom_call.1} parent=1 // loop_body
      %s18 = ssub.s32 %s13, 1
      %s19 = ssub.s32 %s13, 2
      %s26 = sadd.s32 1, %s21
      %p27 = scmp.ge.s32.totalorder %s26, 1
      %s28 = scalar_select %p27, 0, %s26
      %s29 = sadd.s32 1, %s20
      %s30 = scalar_select %p27, %s29, %s20
      %p31 = scmp.ge.s32.totalorder %s30, 2
      %s32 = scalar_select %p31, 0, %s30
      %s33 = ssub.s32 %s20, %s32
      %s34 = ssub.s32 %s21, %s28
      %s35 = sor.u32 %s33, %s34
      %p36 = scmp.eq.s32.totalorder %s35, 0
      %s38 = sadd.s32 %s37, 1
      %s39 = scalar_select %p36, %s37, %s38
      %p42 = pneg %p36
      %p43 = scmp.eq.s32.totalorder %s13, 1
      %p44 = por %p42, %p43
      %p45 = scmp.ne.s32.totalorder %s37, %s40
      %p46 = scmp.eq.s32.totalorder %s13, 0
      %p47 = por %p45, %p46
      %p48 = scmp.ne.s32.totalorder %s37, %s40
      %p49 = scmp.eq.s32.totalorder %s18, 1
      %p50 = por %p48, %p49
      %p51 = scmp.ne.s32.totalorder %s40, %s41
      %p52 = scmp.eq.s32.totalorder %s18, 0
      %p53 = por %p51, %p52
      %p54 = scmp.ne.s32.totalorder %s40, %s41
      %p55 = scmp.eq.s32.totalorder %s19, 1
      %p56 = por %p54, %p55
      %p58 = scmp.ne.s32.totalorder %s41, %s57
      %p59 = scmp.eq.s32.totalorder %s19, 0
      %p60 = por %p58, %p59
      %s61 = ssub.s32 %s20, %s32
      %s62 = ssub.s32 %s21, %s28
      %s63 = sor.u32 %s61, %s62
      %p64 = scmp.eq.s32.totalorder %s63, 0
      %s66 = sadd.s32 %s65, 1
      %s67 = scalar_select %p64, %s65, %s66
      %p70 = pneg %p64
      %p71 = scmp.eq.s32.totalorder %s13, 1
      %p72 = por %p70, %p71
      %p73 = scmp.ne.s32.totalorder %s65, %s68
      %p74 = scmp.eq.s32.totalorder %s13, 0
      %p75 = por %p73, %p74
      %p76 = scmp.ne.s32.totalorder %s65, %s68
      %p77 = scmp.eq.s32.totalorder %s18, 1
      %p78 = por %p76, %p77
      %p79 = scmp.ne.s32.totalorder %s68, %s69
      %p80 = scmp.eq.s32.totalorder %s18, 0
      %p81 = por %p79, %p80
      %p82 = scmp.ne.s32.totalorder %s68, %s69
      %p83 = scmp.eq.s32.totalorder %s19, 1
      %p84 = por %p82, %p83
      %p86 = scmp.ne.s32.totalorder %s69, %s85
      %p87 = scmp.eq.s32.totalorder %s19, 0
      %p88 = por %p86, %p87
      %p89 = scmp.le.s32.totalorder 1, %s13
      %p90 = scmp.lt.s32.totalorder %s13, 3
      %p91 = pnand %p89, %p90
      %p92 = pneg %p91
      // Predicated region
      $region9: #{tpu_custom_call.1} parent=5 // pred_check
        _
      $region10: #{tpu_custom_call.1} parent=5 // pred_check_branch
        %94 = sbr.rel (%p91) target = $region12
      $region11: #{tpu_custom_call.1} parent=5 // pred_region
        %s95 = ssub.s32 %s13, 1
      $region12: #{tpu_custom_call.1} parent=5 // pred_fallthru
        _
      %p96 = scmp.lt.s32.totalorder %s13, 2
      // Predicated region
      $region13: #{tpu_custom_call.1} parent=5 // pred_check
        %p97 = pneg %p96
      $region14: #{tpu_custom_call.1} parent=5 // pred_check_branch
        %99 = sbr.rel (%p97) target = $region16
      $region15: #{tpu_custom_call.1} parent=5 // pred_region
        // Predicated region
        $region17: #{tpu_custom_call.1} parent=15 // pred_check
          %p100 = pneg %p47
        $region18: #{tpu_custom_call.1} parent=15 // pred_check_branch
          %102 = sbr.rel (%p100) target = $region20
        $region19: #{tpu_custom_call.1} parent=15 // pred_region
          %s103 = sand.u32 %s37, 1
          %s104 = scalar_lea.sflag [#allocation3], %s103
          %s105 = sand.u32 %s37, 1
          %s106 = smul.addr %s105, 4
          %s107 = scalar_lea.vmem [#allocation2], %s106
          %s108 = smul.u32 4, %s21
          %s110 = ssub.s32 64, 64
          %111 = vsyncadd %s104, %s110
          %s112 = smul.addr %s20, 4
          %s113 = sadd.s32 %s108, %s112
          %s114 = smul.addr %s113, 16
          %s115 = scalar_lea.hbm %s0, %s114
          %s116 = sshll.u32 %s107, 4
          %s117 = int_to_ptr.vmem [resolvable:$true] %s116
          %122 = dma.hbm_to_vmem [thread:$0]  %s115, 64, %s117, %s104, 16, 16, 1
        $region20: #{tpu_custom_call.1} parent=15 // pred_fallthru
          _
      $region16: #{tpu_custom_call.1} parent=5 // pred_fallthru
        _
      %p123 = scmp.le.s32.totalorder 1, %s13
      %p124 = scmp.lt.s32.totalorder %s13, 3
      %p125 = pnand %p123, %p124
      %p126 = pneg %p125
      // Predicated region
      $region21: #{tpu_custom_call.1} parent=5 // pred_check
        _
      $region22: #{tpu_custom_call.1} parent=5 // pred_check_branch
        %128 = sbr.rel (%p125) target = $region24
      $region23: #{tpu_custom_call.1} parent=5 // pred_region
        %s129 = ssub.s32 %s13, 1
        %s130 = sand.u32 %s40, 1
        %s131 = scalar_lea.sflag [#allocation3], %s130
        %s132 = sand.u32 %s40, 1
        %s133 = smul.addr %s132, 4
        %s134 = scalar_lea.vmem [#allocation2], %s133
        // Predicated region
        $region25: #{tpu_custom_call.1} parent=23 // pred_check
          %p135 = pneg %p53
        $region26: #{tpu_custom_call.1} parent=23 // pred_check_branch
          %137 = sbr.rel (%p135) target = $region28
        $region27: #{tpu_custom_call.1} parent=23 // pred_region
          %138 = dma.done %s131, 64
        $region28: #{tpu_custom_call.1} parent=23 // pred_fallthru
          _
        %s139 = sand.u32 %s40, 1
        %s140 = scalar_lea.sflag [#allocation3], %s139
        %s141 = sand.u32 %s40, 1
        %s142 = smul.addr %s141, 4
        %s143 = scalar_lea.vmem [#allocation2], %s142
        %p144 = pneg %p53
        %p145 = pneg %p50
        %p146 = pneg %p81
        %p147 = pneg %p78
        %s148 = sand.u32 %s68, 1
        %s149 = scalar_lea.sflag [#allocation4], %s148
        %s150 = sand.u32 %s68, 1
        %s151 = smul.addr %s150, 4
        %s152 = scalar_lea.vmem [#allocation5], %s151
        %s153 = smul.u32 4, %s23
        %v154 = vld [vmem:[%s134] sm:$0x1]
        %v155 = vld [vmem:[%s134 + $0x1] sm:$0x1]
        %v156 = vld [vmem:[%s134 + $0x2] sm:$0x1]
        %v157 = vld [vmem:[%s134 + $0x3] sm:$0x1]
        %v162 = vcombine.low %v154, %v155
        %v163 = vcombine.low %v156, %v157
        %v165 = vunpack.c.l.s4 1966171168
        %v166 = vunpack.c.0.s8 %v165
        %v167 = vlaneseq
        %v168 = vshrl.u32 %v167, 7
        %v169 = vsub.s32 %v166, %v168
        %v170 = vrot.slane %v162, %v169
        %v172 = vunpack.c.l.s4 1966171168
        %v173 = vunpack.c.0.s8 %v172
        %v174 = vlaneseq
        %v175 = vshrl.u32 %v174, 7
        %v176 = vsub.s32 %v173, %v175
        %v177 = vrot.slane %v163, %v176
        %v178 = vcombine.low %v170, %v177
        %v180 = vunpack.c.l.s4 1966171168
        %v181 = vunpack.c.0.s8 %v180
        %v182 = vlaneseq
        %v183 = vshrl.u32 %v182, 7
        %v184 = vsub.s32 %v181, %v183
        %v185 = vrot.slane %v178, %v184
        %vm187 = vcmask 125952
        %188 = vst.msk [vmem:[%s152] sm:$0xf] %vm187, %v185
        %s189 = sand.u32 %s68, 1
        %s190 = scalar_lea.sflag [#allocation4], %s189
        %s191 = sand.u32 %s68, 1
        %s192 = smul.addr %s191, 4
        %s193 = scalar_lea.vmem [#allocation5], %s192
        // Predicated region
        $region29: #{tpu_custom_call.1} parent=23 // pred_check
          %p194 = pneg %p78
        $region30: #{tpu_custom_call.1} parent=23 // pred_check_branch
          %196 = sbr.rel (%p194) target = $region32
        $region31: #{tpu_custom_call.1} parent=23 // pred_region
          %s198 = ssub.s32 64, 64
          %199 = vsyncadd %s190, %s198
          %s200 = sadd.s32 %s23, %s22
          %s201 = smul.addr %s200, 64
          %s202 = scalar_lea.hbm %s1, %s201
          %s204 = sshll.u32 %s193, 4
          %s205 = int_to_ptr.vmem [resolvable:$true] %s204
          %207 = dma.vmem_to_hbm [thread:$0]  %s205, 64, %s202, %s190
        $region32: #{tpu_custom_call.1} parent=23 // pred_fallthru
          _
      $region24: #{tpu_custom_call.1} parent=5 // pred_fallthru
        _
      %p208 = scmp.le.s32.totalorder 2, %s13
      // Predicated region
      $region33: #{tpu_custom_call.1} parent=5 // pred_check
        %p209 = pneg %p208
      $region34: #{tpu_custom_call.1} parent=5 // pred_check_branch
        %211 = sbr.rel (%p209) target = $region36
      $region35: #{tpu_custom_call.1} parent=5 // pred_region
        %s212 = ssub.s32 %s13, 2
        // Predicated region
        $region37: #{tpu_custom_call.1} parent=35 // pred_check
          %p213 = pneg %p84
        $region38: #{tpu_custom_call.1} parent=35 // pred_check_branch
          %215 = sbr.rel (%p213) target = $region40
        $region39: #{tpu_custom_call.1} parent=35 // pred_region
          %s216 = sand.u32 %s69, 1
          %s217 = scalar_lea.sflag [#allocation4], %s216
          %s218 = sand.u32 %s69, 1
          %s219 = smul.addr %s218, 4
          %s220 = scalar_lea.vmem [#allocation5], %s219
          %221 = dma.done %s217, 64
        $region40: #{tpu_custom_call.1} parent=35 // pred_fallthru
          _
      $region36: #{tpu_custom_call.1} parent=5 // pred_fallthru
        _
    $region6: #{tpu_custom_call.1} parent=1 // loop_footer
      %s17 = sadd.s32 1, %s13
    $region7: #{tpu_custom_call.1} parent=1 // loop_footer_branch
      %12 = sbr.rel target = $region3
    $region8: #{tpu_custom_call.1} parent=1 // loop_exit
      _
    %222 = vsyncpa [#allocation3], 1
    %s223 = scalar_lea.sflag [#allocation3], 1
    %224 = vsyncpa %s223, 1
    %225 = vsyncpa [#allocation4], 1
    %s226 = scalar_lea.sflag [#allocation4], 1
    %227 = vsyncpa %s226, 1

</llo_original>
